<compile_context>
chip_gen: v5e
topology: v5e:2x2
jax: 0.10.0
libtpu: 0.0.40
codegen_flags: <defaults>
</compile_context>

<pallas_src>
import numpy as np
import jax
import jax.numpy as jnp
from jax.experimental import pallas as pl
from jax.experimental.pallas import tpu as pltpu

NUM_STEPS = 4                 # DynamicFieldPropagator.num_steps
DT = 0.01                     # DynamicFieldPropagator.dt
DIFFUSION_COEFF_INIT = 0.1    # PDEFieldEvolver.diffusion_coeff = nn.Parameter(tensor(0.1))


def _propagate_kernel(a_ref, f_ref, o_ref):
    # a_ref: (M, M) fused propagator matrix (f32)
    # f_ref / o_ref: (M, lane_tile) lane-dense slab tile (M on sublanes, B*D on lanes)
    o_ref[...] = jnp.dot(
        a_ref[...], f_ref[...], preferred_element_type=jnp.float32
    ).astype(o_ref.dtype)
    # TODO(synk): TokenFieldInterference is referenced by DynamicFieldPropagator but its
    # definition is not present in the reference source; the interference step is omitted.


def _replicated_laplacian(M: int) -> np.ndarray:
    """Static 1-D Laplacian stencil (without the 1/dx^2 factor) with the reference's
    replicated-boundary rows: deriv[0] = deriv[1], deriv[-1] = deriv[-2]."""
    L = np.zeros((M, M), dtype=np.float32)
    for i in range(1, M - 1):
        L[i, i - 1] += 1.0
        L[i, i] += -2.0
        L[i, i + 1] += 1.0
    if M > 2:
        L[0, :] = L[1, :]
        L[M - 1, :] = L[M - 2, :]
    return L


def _pick_lane_tile(BD: int, M: int) -> int:
    """Largest lane tile that is a multiple of 128, divides B*D and keeps an f32
    slab block at ~2 MiB (safe under v7x's 64 MiB VMEM with double-buffered
    in+out); prefers >= 2 grid steps (v7x megacore). Falls back to the full lane
    extent (always legal) when B*D is small or not 128-aligned."""
    if BD <= 128 or BD % 128 != 0:
        return BD
    max_lanes = max(128, (2 * 1024 * 1024) // (4 * max(M, 1)))
    max_lanes = (max_lanes // 128) * 128
    cands = [t for t in range(128, BD + 1, 128) if BD % t == 0 and t <= max_lanes]
    if not cands:
        return 128
    multi = [t for t in cands if BD // t >= 2]
    return max(multi) if multi else max(cands)


def dynamic_field_propagator(field, grid_points, dt=DT):
    """field: [B, M, D], grid_points: [B, M, P] -> evolved field [B, M, D]."""
    B, M, D = field.shape

    # --- scalar / matrix setup in plain JAX (matches the PyTorch forward) ---
    dx = grid_points[0, 1, 0] - grid_points[0, 0, 0]   # uniform-grid assumption, as in the reference
    diff_coeff = jax.nn.sigmoid(jnp.float32(DIFFUSION_COEFF_INIT))
    s = diff_coeff * jnp.float32(dt) / (dx * dx)

    L = jnp.asarray(_replicated_laplacian(M))
    step = jnp.eye(M, dtype=jnp.float32) + s * L       # one explicit-Euler step
    A = step
    for _ in range(NUM_STEPS - 1):                     # A = (I + s*L)^NUM_STEPS
        A = jnp.dot(A, step, precision=jax.lax.Precision.HIGHEST)

    # --- lane-dense layout: (B, M, D) -> (M, B*D) (stencil axis on sublanes) ---
    BD = B * D
    slab = jnp.transpose(field, (1, 0, 2)).reshape(M, BD)

    lane_tile = _pick_lane_tile(BD, M)
    nblocks = BD // lane_tile

    out_slab = pl.pallas_call(
        _propagate_kernel,
        out_shape=jax.ShapeDtypeStruct((M, BD), field.dtype),
        grid_spec=pltpu.PrefetchScalarGridSpec(
            num_scalar_prefetch=0,
            grid=(nblocks,),
            in_specs=[
                pl.BlockSpec((M, M), lambda j: (0, 0)),          # propagator matrix
                pl.BlockSpec((M, lane_tile), lambda j: (0, j)),  # lane-dense field slab
            ],
            out_specs=pl.BlockSpec((M, lane_tile), lambda j: (0, j)),
        ),
        compiler_params=pltpu.CompilerParams(
            dimension_semantics=("parallel",)),
    )(A, slab)

    return jnp.transpose(out_slab.reshape(M, B, D), (1, 0, 2))


def _reference(field, grid_points, dt=DT):
    """Pure-JAX reference mirroring PDEFieldEvolver._diffusion_evolution, looped num_steps times."""
    dx = grid_points[0, 1, 0] - grid_points[0, 0, 0]
    Dc = jax.nn.sigmoid(jnp.float32(DIFFUSION_COEFF_INIT))
    f = field.astype(jnp.float32)
    for _ in range(NUM_STEPS):
        interior = (f[:, 2:, :] - 2.0 * f[:, 1:-1, :] + f[:, :-2, :]) / (dx * dx)
        deriv = jnp.concatenate([interior[:, :1], interior, interior[:, -1:]], axis=1)
        f = f + Dc * jnp.float32(dt) * deriv
    return f.astype(field.dtype)


if __name__ == "__main__":
    B, M, D, P = 2, 16, 32, 1   # batch, grid points, embed_dim, pos_dim

    key = jax.random.PRNGKey(0)
    k_field, _ = jax.random.split(key)
    field = jax.random.normal(k_field, (B, M, D), dtype=jnp.float32)
    # uniform 1-D spatial grid in [0, 1), same for every batch element
    grid_1d = jnp.linspace(0.0, 1.0, M, endpoint=False, dtype=jnp.float32)
    grid_points = jnp.broadcast_to(grid_1d[None, :, None], (B, M, P))

    out = dynamic_field_propagator(field, grid_points)
    out = jax.block_until_ready(out)

    ref = _reference(field, grid_points)
    assert out.shape == (B, M, D) and out.dtype == field.dtype
    # relative-to-magnitude check (the explicit scheme amplifies values for this dx,
    # so compare against the output scale rather than a raw atol)
    err = float(jnp.max(jnp.abs(out - ref)))
    scale = float(jnp.maximum(1.0, jnp.max(jnp.abs(ref))))
    assert err <= 1e-4 * scale, f"mismatch vs JAX reference: err={err}, scale={scale}"

    print("KERNEL_OK")
</pallas_src>

<mosaic_0001>
module attributes {stable_mosaic.version = 11 : i64} {
  func.func @_propagate_kernel(%arg0: i32, %arg1: memref<16x16xf32, #tpu.memory_space<vmem>>, %arg2: memref<16x64xf32, #tpu.memory_space<vmem>>, %arg3: memref<16x64xf32, #tpu.memory_space<vmem>>) attributes {dimension_semantics = [#tpu.dimension_semantics<parallel>], iteration_bounds = array<i64: 1>, scalar_prefetch = 0 : i64, scratch_operands = 0 : i64, tpu.core_type = #tpu.core_type<tc>, window_params = [{pipeline_mode = #tpu.pipeline_mode<synchronous>, transform_indices = @transform_0, window_bounds = array<i64: 16, 16>}, {transform_indices = @transform_1, window_bounds = array<i64: 16, 64>}, {transform_indices = @transform_2, window_bounds = array<i64: 16, 64>}]} {
    %c0 = arith.constant 0 : index
    %c0_0 = arith.constant 0 : index
    %0 = vector.load %arg1[%c0, %c0_0] : memref<16x16xf32, #tpu.memory_space<vmem>>, vector<16x16xf32>
    %c0_1 = arith.constant 0 : index
    %c0_2 = arith.constant 0 : index
    %1 = vector.load %arg2[%c0_1, %c0_2] : memref<16x64xf32, #tpu.memory_space<vmem>>, vector<16x64xf32>
    %cst = arith.constant dense<0.000000e+00> : vector<16x64xf32>
    %2 = tpu.matmul %0, %1, %cst {dimension_numbers = #tpu.dot_dimension_numbers<[1], [0], [0], [1], [0, 0, 1, 1], [], []>} : vector<16x16xf32>, vector<16x64xf32>, vector<16x64xf32> -> vector<16x64xf32>
    %c0_3 = arith.constant 0 : index
    %c0_4 = arith.constant 0 : index
    %3 = vector.load %arg3[%c0_3, %c0_4] : memref<16x64xf32, #tpu.memory_space<vmem>>, vector<16x64xf32>
    tpu.vector_store %arg3[%c0_3, %c0_4], %2 {strides = array<i32>} : memref<16x64xf32, #tpu.memory_space<vmem>>, vector<16x64xf32>,
    return
  }
  func.func @transform_0(%arg0: i32) -> (i32, i32) {
    %c0_i32 = arith.constant 0 : i32
    %c0_i32_0 = arith.constant 0 : i32
    %c0_i32_1 = arith.constant 0 : i32
    return %c0_i32, %c0_i32_0 : i32, i32
  }
  func.func @transform_1(%arg0: i32) -> (i32, i32) {
    %c0_i32 = arith.constant 0 : i32
    %c0_i32_0 = arith.constant 0 : i32
    return %c0_i32, %arg0 : i32, i32
  }
  func.func @transform_2(%arg0: i32) -> (i32, i32) {
    %c0_i32 = arith.constant 0 : i32
    %c0_i32_0 = arith.constant 0 : i32
    return %c0_i32, %arg0 : i32, i32
  }
}

</mosaic_0001>

<llo_original>
// kernel: tpu_custom_call.1
$region0: #{tpu_custom_call.1}
  #allocation0 [shape = 'u32[]', space=smem, size = 0x4, offset = 0x4, fixed_abs, tag = 'smem constant byte address 0x4 - core index']
  #allocation1 [shape = 'u32[72,128]{1,0:T(1,128)}', space=vmem, size = 0x9000, scoped, tag = 'internal scratch']
  %s0 = inlined_call_operand.hbm [shape: f32[16,16], index: 0, kind: input, shape index: {}]
  %s1 = inlined_call_operand.hbm [shape: f32[16,64], index: 1, kind: input, shape index: {}]
  %s2 = inlined_call_operand.hbm [shape: f32[16,64], index: 2, kind: output, shape index: {}]
  %s3 = sld [smem:[#allocation0]]
  $region26: #{tpu_custom_call.1} parent=0
    _
  %s5 = ssub.s32 1, %s3
  %s6 = scalar_select 0, %s5, %s3
  $region1: #{tpu_custom_call.1} parent=0
    #allocation2 [shape = 'u8[8192]{0}', space=vmem, size = 0x2000, scoped, tag = 'input window, operand 0, single buffered']
    #allocation3 [shape = 's32[1]{0}', space=sflag, size = 0x4, scoped, tag = 'scoped memory for tpu_custom_call.1']
    #allocation4 [shape = 's32[1]{0}', space=sflag, size = 0x4, scoped, tag = 'scoped memory for tpu_custom_call.1']
    #allocation5 [shape = 'u8[8192]{0}', space=vmem, size = 0x2000, scoped, tag = 'input window, operand 1, single buffered']
    #allocation6 [shape = 's32[1]{0}', space=sflag, size = 0x4, scoped, tag = 'scoped memory for tpu_custom_call.1']
    #allocation7 [shape = 'u8[8192]{0}', space=vmem, size = 0x2000, scoped, tag = 'output window, operand 0, single buffered']
    %7 = vsyncpa [#allocation3], 0
    %8 = vsyncpa [#allocation6], 0
    %9 = vsyncpa [#allocation4], 0
    // Predicated region
    $region2: #{tpu_custom_call.1} parent=1 // pred_check
      _
    $region3: #{tpu_custom_call.1} parent=1 // pred_check_branch
      %11 = sbr.rel (0) target = $region5
    $region4: #{tpu_custom_call.1} parent=1 // pred_region
      %13 = vsyncadd [#allocation3], 0
      %s14 = sshll.u32 %s0, 4
      %s15 = int_to_ptr.hbm [resolvable:$true] %s14
      %s16 = sshll.u32 [#allocation2], 4
      %s17 = int_to_ptr.vmem [resolvable:$true] %s16
      %22 = dma.hbm_to_vmem [thread:$0]  %s15, 256, %s17, [#allocation3], 128, 128, 8
    $region5: #{tpu_custom_call.1} parent=1 // pred_fallthru
      _
    // Predicated region
    $region6: #{tpu_custom_call.1} parent=1 // pred_check
      _
    $region7: #{tpu_custom_call.1} parent=1 // pred_check_branch
      %24 = sbr.rel (0) target = $region9
    $region8: #{tpu_custom_call.1} parent=1 // pred_region
      %26 = vsyncadd [#allocation6], 0
      %s27 = sshll.u32 %s1, 4
      %s28 = int_to_ptr.hbm [resolvable:$true] %s27
      %s29 = sshll.u32 [#allocation5], 4
      %s30 = int_to_ptr.vmem [resolvable:$true] %s29
      %35 = dma.hbm_to_vmem [thread:$0]  %s28, 256, %s30, [#allocation6], 128, 128, 8
    $region9: #{tpu_custom_call.1} parent=1 // pred_fallthru
      _
    // Predicated region
    $region10: #{tpu_custom_call.1} parent=1 // pred_check
      _
    $region11: #{tpu_custom_call.1} parent=1 // pred_check_branch
      %37 = sbr.rel (0) target = $region13
    $region12: #{tpu_custom_call.1} parent=1 // pred_region
      %39 = dma.done [#allocation3], 256
    $region13: #{tpu_custom_call.1} parent=1 // pred_fallthru
      _
    // Predicated region
    $region14: #{tpu_custom_call.1} parent=1 // pred_check
      _
    $region15: #{tpu_custom_call.1} parent=1 // pred_check_branch
      %41 = sbr.rel (0) target = $region17
    $region16: #{tpu_custom_call.1} parent=1 // pred_region
      %43 = dma.done [#allocation6], 256
    $region17: #{tpu_custom_call.1} parent=1 // pred_fallthru
      _
    %v44 = vld [vmem:[#allocation2] sm:$0xff]
    %v45 = vld [vmem:[#allocation2 + $0x8] sm:$0xff]
    %v46 = vld [vmem:[#allocation5] sm:$0xff]
    %v47 = vld [vmem:[#allocation5 + $0x8] sm:$0xff]
    %vm48 = vcmask 130048
    %v50 = vsel %vm48, %v44, 0
    %v53 = vsel %vm48, %v45, 0
    %55 = vmatpush.msra.mxu0 0.0
    %56 = vmatpush.msra.mxu0 0.0
    %57 = vmatpush.msra.mxu0 0.0
    %58 = vmatpush.msra.mxu0 0.0
    %59 = vmatpush.msra.mxu0 0.0
    %60 = vmatpush.msra.mxu0 0.0
    %61 = vmatpush.msra.mxu0 0.0
    %62 = vmatpush.msra.mxu0 0.0
    %63 = vmatpush.msra.mxu0 0.0
    %64 = vmatpush.msra.mxu0 0.0
    %65 = vmatpush.msra.mxu0 0.0
    %66 = vmatpush.msra.mxu0 0.0
    %67 = vmatpush.msra.mxu0 0.0
    %68 = vmatpush.msra.mxu0 0.0
    %69 = vmatpush.msra.mxu0 %v47
    %70 = vmatpush.msra.mxu0 %v46
    %71 = vmatmul.f32.gmra.mxu0 %v50
    %v72 = vpop.f32.mrf.mxu0
    %v73 = vadd.f32 0.0, %v72
    %74 = vmatmul.f32.gmra.mxu0 %v53
    %v75 = vpop.f32.mrf.mxu0
    %v76 = vadd.f32 0.0, %v75
    %77 = vdwg.mxu0
    %vm78 = vcmask 523264
    %79 = vst.msk [vmem:[#allocation7] sm:$0xff] %vm78, %v73
    %80 = vst.msk [vmem:[#allocation7 + $0x8] sm:$0xff] %vm78, %v76
    // Predicated region
    $region18: #{tpu_custom_call.1} parent=1 // pred_check
      _
    $region19: #{tpu_custom_call.1} parent=1 // pred_check_branch
      %82 = sbr.rel (0) target = $region21
    $region20: #{tpu_custom_call.1} parent=1 // pred_region
      %84 = vsyncadd [#allocation4], 0
      %s85 = sshll.u32 [#allocation7], 4
      %s86 = int_to_ptr.vmem [resolvable:$true] %s85
      %s87 = sshll.u32 %s2, 4
      %s88 = int_to_ptr.hbm [resolvable:$true] %s87
      %93 = dma.vmem_to_hbm [thread:$0]  %s86, 256, %s88, [#allocation4], 128, 128, 8
    $region21: #{tpu_custom_call.1} parent=1 // pred_fallthru
      _
    // Predicated region
    $region22: #{tpu_custom_call.1} parent=1 // pred_check
      _
    $region23: #{tpu_custom_call.1} parent=1 // pred_check_branch
      %95 = sbr.rel (0) target = $region25
    $region24: #{tpu_custom_call.1} parent=1 // pred_region
      %97 = dma.done [#allocation4], 256
    $region25: #{tpu_custom_call.1} parent=1 // pred_fallthru
      _
    %98 = vsyncpa [#allocation3], 1
    %99 = vsyncpa [#allocation6], 1
    %100 = vsyncpa [#allocation4], 1

</llo_original>
